<compile_context>
chip_gen: v5e
topology: v5e:2x2
jax: 0.10.0
libtpu: 0.0.40
codegen_flags: <defaults>
</compile_context>

<pallas_src>
import numpy as np
import jax
import jax.numpy as jnp
from jax import lax
from jax.experimental import pallas as pl
from jax.experimental.pallas import tpu as pltpu


# ---------------------------------------------------------------------------
# depthcharge-style MassEncoder terms / encoding (host helpers + reference)
# ---------------------------------------------------------------------------
def _mass_encoder_terms(dim, min_wavelength=0.001, max_wavelength=10000.0):
    n_sin = dim // 2
    n_cos = dim - n_sin
    base = min_wavelength / (2.0 * np.pi)
    scale = max_wavelength / min_wavelength
    sin_term = base * scale ** (np.arange(n_sin, dtype=np.float64) / (n_sin - 1))
    cos_term = base * scale ** (np.arange(n_cos, dtype=np.float64) / (n_cos - 1))
    return sin_term.astype(np.float32), cos_term.astype(np.float32)


def mass_encode(x, dim):
    """MassEncoder: x (..., 1) -> (..., dim) = [sin(x / s_i), cos(x / c_j)]."""
    sin_t, cos_t = _mass_encoder_terms(dim)
    s = jnp.sin(x / jnp.asarray(sin_t))
    c = jnp.cos(x / jnp.asarray(cos_t))
    return jnp.concatenate([s, c], axis=-1)


def _round_up(x, m):
    return ((x + m - 1) // m) * m


def _build_arg_projection(L, q):
    """P (2L, L*2q) and bias (1, L*2q) so that
       sin([tok_mass | suffix] @ P + bias) yields, for each position l, the
       [prefix MassEncoder(q) | suffix MassEncoder(q)] columns already in final
       output order (cos(x) = sin(x + pi/2) via the bias)."""
    n_sin = q // 2
    sin_t, cos_t = _mass_encoder_terms(q)
    inv = np.concatenate([1.0 / sin_t, 1.0 / cos_t]).astype(np.float32)    # (q,)
    is_cos = np.concatenate([np.zeros(n_sin, np.float32),
                             np.ones(q - n_sin, np.float32)])              # (q,)
    P = np.zeros((2 * L, L * 2 * q), np.float32)
    bias = np.zeros((1, L * 2 * q), np.float32)
    for l in range(L):
        c0 = l * 2 * q
        P[l, c0:c0 + q] = inv                         # per-token ("prefix") mass
        P[L + l, c0 + q:c0 + 2 * q] = inv             # suffix mass
        bias[0, c0:c0 + q] = is_cos * (np.pi / 2.0)
        bias[0, c0 + q:c0 + 2 * q] = is_cos * (np.pi / 2.0)
    return P, bias


# ---------------------------------------------------------------------------
# Pallas kernel: one grid step = a tile of TILE_R flattened (b, n) rows.
# ---------------------------------------------------------------------------
def _msa_embed_kernel(tokens_ref,    # (TR, L)      int32 tokens
                      tokmass_ref,   # (TR, L)      f32 per-token mass (exact)
                      suffix_ref,    # (TR, L)      f32 precursor - cumsum(mass)
                      prec_ref,      # (TR, D)      f32 precursor feature (added at l=0)
                      emb_ref,       # (VP, aaDim)  f32 zero-padded aa embedding table
                      p_ref,         # (2L, L*2q)   f32 scale/scatter for sinusoid args
                      bias_ref,      # (1, L*2q)    f32 +pi/2 on the cos columns
                      out_ref):      # (TR, L*D)    f32 lane-dense output block
    TR, L = tokens_ref.shape
    VP, aa_dim = emb_ref.shape
    D = prec_ref.shape[1]
    two_q = p_ref.shape[1] // L

    toks = tokens_ref[...]

    # All sinusoid arguments for every (position, pre/suf, term) in one
    # lane-dense (TR, L*2q) matrix via a tiny K=2L MXU matmul, then a single
    # dense sin pass on the EUP (cos columns handled by the +pi/2 bias).
    cat = jnp.concatenate([tokmass_ref[...], suffix_ref[...]], axis=1)     # (TR, 2L)
    args = jnp.dot(cat, p_ref[...], preferred_element_type=jnp.float32)    # (TR, L*2q)
    enc = jnp.sin(args + bias_ref[...])                                    # (TR, L*2q)

    vocab_iota = lax.broadcasted_iota(jnp.int32, (1, VP), 1)               # (1, VP)

    # Per position: lane-dense one-hot -> MXU embedding lookup, concat with the
    # already-ordered encoding slice, one (TR, D)-wide store (8 stores per tile
    # instead of 24 narrow masked stores); precursor folded into the l=0 write.
    for l in range(L):
        oh = (toks[:, l:l + 1] == vocab_iota).astype(jnp.float32)          # (TR, VP)
        tgt = jnp.dot(oh, emb_ref[...],
                      preferred_element_type=jnp.float32)                  # (TR, aaDim)
        blk = jnp.concatenate(
            [tgt, enc[:, l * two_q:(l + 1) * two_q]], axis=1)              # (TR, D)
        if l == 0:
            blk = blk + prec_ref[...]        # tgtTemp[:, :, 0, :] += precursors
        out_ref[:, l * D:(l + 1) * D] = blk


# ---------------------------------------------------------------------------
# Wrapper (precursor glue, mass lookup/cumsum, row flattening, pallas_call)
# ---------------------------------------------------------------------------
def msa_peptide_embed(tokens, precursors, mass_table, aa_emb, charge_emb,
                      dim_model):
    B, N, L = tokens.shape
    V, aa_dim = aa_emb.shape
    D = dim_model
    q = D // 4
    assert aa_dim + 2 * q == D, "dim_model must be divisible by 4"

    # --- per-spectrum precursor feature row (B, D): tiny, plain-JAX glue ----
    masses_enc = mass_encode(precursors[:, None, 0:1], D // 2)[:, 0, :]    # (B, D/2)
    charges = charge_emb[precursors[:, 1].astype(jnp.int32) - 1]           # (B, D/2)
    prec_half = masses_enc + charges
    zero_enc = mass_encode(jnp.zeros((1, 1), jnp.float32), q)              # (1, q)
    zero_enc = jnp.broadcast_to(zero_enc, (B, q))
    prec_vec = jnp.concatenate([prec_half, zero_enc, zero_enc],
                               axis=1).astype(jnp.float32)                 # (B, D)

    # --- per-token mass + suffix mass (exact f32; O(R*L), ~3% of the output;
    #     the PyTorch module computes deMass/get_suffix_mass host-side too) ---
    tok_mass = mass_table.astype(jnp.float32)[tokens]                      # (B, N, L)
    suffix = (precursors[:, 0].astype(jnp.float32)[:, None, None]
              - jnp.cumsum(tok_mass, axis=-1))                             # (B, N, L)

    # --- flatten (B, N) -> rows; big tiles, but always >= 2 grid steps ------
    R = B * N
    TARGET = 512
    R8 = _round_up(R, 8)
    if R8 >= 2 * TARGET:
        TILE_R = TARGET
    else:
        TILE_R = max(8, _round_up((R8 + 1) // 2, 8))
    R_pad = _round_up(R, TILE_R)
    if R_pad // TILE_R < 2:          # >= 2 steps so both v7x TensorCores get work
        R_pad = 2 * TILE_R

    tokens_rows = tokens.reshape(R, L).astype(jnp.int32)
    tokmass_rows = tok_mass.reshape(R, L)
    suffix_rows = suffix.reshape(R, L)
    prec_rows = jnp.broadcast_to(prec_vec[:, None, :], (B, N, D)).reshape(R, D)

    pad = R_pad - R
    if pad:
        tokens_rows = jnp.pad(tokens_rows, ((0, pad), (0, 0)))
        tokmass_rows = jnp.pad(tokmass_rows, ((0, pad), (0, 0)))
        suffix_rows = jnp.pad(suffix_rows, ((0, pad), (0, 0)))
        prec_rows = jnp.pad(prec_rows, ((0, pad), (0, 0)))

    # --- vocabulary padded to the 128-lane width ---------------------------
    VP = max(128, _round_up(V, 128))
    emb_pad = jnp.zeros((VP, aa_dim), jnp.float32).at[:V].set(
        aa_emb.astype(jnp.float32))

    P_np, bias_np = _build_arg_projection(L, q)
    P = jnp.asarray(P_np)          # (2L, L*2q)
    bias = jnp.asarray(bias_np)    # (1, L*2q)

    out = pl.pallas_call(
        _msa_embed_kernel,
        out_shape=jax.ShapeDtypeStruct((R_pad, L * D), jnp.float32),
        grid=(R_pad // TILE_R,),
        in_specs=[
            pl.BlockSpec((TILE_R, L), lambda r: (r, 0)),          # tokens
            pl.BlockSpec((TILE_R, L), lambda r: (r, 0)),          # per-token mass
            pl.BlockSpec((TILE_R, L), lambda r: (r, 0)),          # suffix mass
            pl.BlockSpec((TILE_R, D), lambda r: (r, 0)),          # precursor feat / row
            pl.BlockSpec((VP, aa_dim), lambda r: (0, 0)),         # aa embedding (padded)
            pl.BlockSpec((2 * L, L * 2 * q), lambda r: (0, 0)),   # sinusoid scale/scatter
            pl.BlockSpec((1, L * 2 * q), lambda r: (0, 0)),       # +pi/2 cos bias
        ],
        out_specs=pl.BlockSpec((TILE_R, L * D), lambda r: (r, 0)),  # lane-dense rows
        compiler_params=pltpu.CompilerParams(
            dimension_semantics=("parallel",)),
    )(tokens_rows, tokmass_rows, suffix_rows, prec_rows, emb_pad, P, bias)

    return out[:R].reshape(B, N, L, D)


# ---------------------------------------------------------------------------
# Pure-JAX reference of the PyTorch forward (numerical self-check)
# ---------------------------------------------------------------------------
def _reference(tokens, precursors, mass_table, aa_emb, charge_emb, dim_model):
    B, N, L = tokens.shape
    D = dim_model
    q = D // 4
    pre_masses = mass_table[tokens]                                   # deMass
    suffix = precursors[:, 0][:, None, None] - jnp.cumsum(pre_masses, axis=-1)
    masses = mass_encode(precursors[:, None, 0:1], D // 2)            # (B,1,D/2)
    charges = charge_emb[precursors[:, 1].astype(jnp.int32) - 1]
    prec = masses + charges[:, None, :]
    zero_enc = mass_encode(jnp.zeros((B, 1, 1), jnp.float32), q)
    prec = jnp.concatenate([prec, zero_enc, zero_enc], axis=2)        # (B,1,D)
    tgt = aa_emb[tokens]                                              # (B,N,L,aaDim)
    pre_enc = mass_encode(pre_masses[..., None], q)
    suf_enc = mass_encode(suffix[..., None], q)
    out = jnp.concatenate([tgt, pre_enc, suf_enc], axis=-1)           # (B,N,L,D)
    out = out.at[:, :, 0, :].add(jnp.broadcast_to(prec, (B, N, D)))
    return out


if __name__ == "__main__":
    key = jax.random.PRNGKey(0)
    dim_model = 32
    max_charge = 5
    B, N, L = 2, 3, 8                 # batch, MSA depth, peptide length
    V = 28                            # len(alphabet.all_toks)
    padding_idx = 0
    aa_dim = dim_model - dim_model // 2   # aaDim

    k1, k2, k3, k4 = jax.random.split(key, 4)

    # Synthetic alphabet idx_to_mass: special tokens (idx 0..3) have mass 0.
    # Masses are scaled down so the fine-resolution sinusoid arguments stay in
    # a well-conditioned f32 range for the numerical self-check.
    masses = jax.random.uniform(k1, (V,), jnp.float32,
                                minval=0.002, maxval=0.02)
    masses = masses.at[:4].set(0.0)

    aa_emb = 0.02 * jax.random.normal(k2, (V, aa_dim), jnp.float32)
    aa_emb = aa_emb.at[padding_idx].set(0.0)          # padding_idx row is zero
    charge_emb = 0.02 * jax.random.normal(k3, (max_charge, dim_model // 2),
                                          jnp.float32)

    tokens = jax.random.randint(k4, (B, N, L), 0, V, jnp.int32)
    prec_mass = jnp.asarray([0.05, 0.08], jnp.float32)
    prec_charge = jnp.asarray([2.0, 3.0], jnp.float32)
    precursors = jnp.stack([prec_mass, prec_charge, prec_mass / prec_charge],
                           axis=1)                    # (B, 3)

    out = msa_peptide_embed(tokens, precursors, masses, aa_emb, charge_emb,
                            dim_model)
    out = jax.block_until_ready(out)

    ref = _reference(tokens, precursors, masses, aa_emb, charge_emb, dim_model)
    ref = jax.block_until_ready(ref)
    np.testing.assert_allclose(np.asarray(out), np.asarray(ref),
                               rtol=2e-3, atol=2e-3)

    print("KERNEL_OK")
</pallas_src>

<mosaic_0001>
module attributes {stable_mosaic.version = 11 : i64} {
  func.func @_msa_embed_kernel(%arg0: i32, %arg1: memref<8x8xi32, #tpu.memory_space<vmem>>, %arg2: memref<8x8xf32, #tpu.memory_space<vmem>>, %arg3: memref<8x8xf32, #tpu.memory_space<vmem>>, %arg4: memref<8x32xf32, #tpu.memory_space<vmem>>, %arg5: memref<128x16xf32, #tpu.memory_space<vmem>>, %arg6: memref<16x128xf32, #tpu.memory_space<vmem>>, %arg7: memref<1x128xf32, #tpu.memory_space<vmem>>, %arg8: memref<8x256xf32, #tpu.memory_space<vmem>>) attributes {dimension_semantics = [#tpu.dimension_semantics<parallel>], iteration_bounds = array<i64: 2>, scalar_prefetch = 0 : i64, scratch_operands = 0 : i64, tpu.core_type = #tpu.core_type<tc>, window_params = [{transform_indices = @transform_0, window_bounds = array<i64: 8, 8>}, {transform_indices = @transform_1, window_bounds = array<i64: 8, 8>}, {transform_indices = @transform_2, window_bounds = array<i64: 8, 8>}, {transform_indices = @transform_3, window_bounds = array<i64: 8, 32>}, {pipeline_mode = #tpu.pipeline_mode<synchronous>, transform_indices = @transform_4, window_bounds = array<i64: 128, 16>}, {pipeline_mode = #tpu.pipeline_mode<synchronous>, transform_indices = @transform_5, window_bounds = array<i64: 16, 128>}, {pipeline_mode = #tpu.pipeline_mode<synchronous>, transform_indices = @transform_6, window_bounds = array<i64: 1, 128>}, {transform_indices = @transform_7, window_bounds = array<i64: 8, 256>}]} {
    %c0 = arith.constant 0 : index
    %c0_0 = arith.constant 0 : index
    %0 = vector.load %arg1[%c0, %c0_0] : memref<8x8xi32, #tpu.memory_space<vmem>>, vector<8x8xi32>
    %c0_1 = arith.constant 0 : index
    %c0_2 = arith.constant 0 : index
    %1 = vector.load %arg2[%c0_1, %c0_2] : memref<8x8xf32, #tpu.memory_space<vmem>>, vector<8x8xf32>
    %c0_3 = arith.constant 0 : index
    %c0_4 = arith.constant 0 : index
    %2 = vector.load %arg3[%c0_3, %c0_4] : memref<8x8xf32, #tpu.memory_space<vmem>>, vector<8x8xf32>
    %3 = tpu.concatenate %1, %2 in 1 : vector<8x8xf32>, vector<8x8xf32> -> vector<8x16xf32>
    %c0_5 = arith.constant 0 : index
    %c0_6 = arith.constant 0 : index
    %4 = vector.load %arg6[%c0_5, %c0_6] : memref<16x128xf32, #tpu.memory_space<vmem>>, vector<16x128xf32>
    %cst = arith.constant dense<0.000000e+00> : vector<8x128xf32>
    %5 = tpu.matmul %3, %4, %cst {dimension_numbers = #tpu.dot_dimension_numbers<[1], [0], [0], [1], [0, 0, 1, 1], [], []>} : vector<8x16xf32>, vector<16x128xf32>, vector<8x128xf32> -> vector<8x128xf32>
    %c0_7 = arith.constant 0 : index
    %c0_8 = arith.constant 0 : index
    %6 = vector.load %arg7[%c0_7, %c0_8] : memref<1x128xf32, #tpu.memory_space<vmem>>, vector<1x128xf32>
    %7 = vector.broadcast %6 : vector<1x128xf32> to vector<8x128xf32>
    %8 = arith.addf %5, %7 : vector<8x128xf32>
    %9 = math.sin %8 : vector<8x128xf32>
    %10 = tpu.iota {dimensions = array<i32: 1>} : vector<1x128xi32>
    %11 = vector.extract_strided_slice %0 {offsets = [0, 0], sizes = [8, 1], strides = [1, 1]} : vector<8x8xi32> to vector<8x1xi32>
    %12 = vector.broadcast %11 : vector<8x1xi32> to vector<8x128xi32>
    %13 = vector.broadcast %10 : vector<1x128xi32> to vector<8x128xi32>
    %14 = arith.cmpi eq, %12, %13 : vector<8x128xi32>
    %15 = arith.extui %14 : vector<8x128xi1> to vector<8x128xi32>
    %16 = arith.sitofp %15 : vector<8x128xi32> to vector<8x128xf32>
    %c0_9 = arith.constant 0 : index
    %c0_10 = arith.constant 0 : index
    %17 = vector.load %arg5[%c0_9, %c0_10] : memref<128x16xf32, #tpu.memory_space<vmem>>, vector<128x16xf32>
    %cst_11 = arith.constant dense<0.000000e+00> : vector<8x16xf32>
    %18 = tpu.matmul %16, %17, %cst_11 {dimension_numbers = #tpu.dot_dimension_numbers<[1], [0], [0], [1], [0, 0, 1, 1], [], []>} : vector<8x128xf32>, vector<128x16xf32>, vector<8x16xf32> -> vector<8x16xf32>
    %19 = vector.extract_strided_slice %9 {offsets = [0, 0], sizes = [8, 16], strides = [1, 1]} : vector<8x128xf32> to vector<8x16xf32>
    %20 = tpu.concatenate %18, %19 in 1 : vector<8x16xf32>, vector<8x16xf32> -> vector<8x32xf32>
    %c0_12 = arith.constant 0 : index
    %c0_13 = arith.constant 0 : index
    %21 = vector.load %arg4[%c0_12, %c0_13] : memref<8x32xf32, #tpu.memory_space<vmem>>, vector<8x32xf32>
    %22 = arith.addf %20, %21 : vector<8x32xf32>
    %c0_14 = arith.constant 0 : index
    %c0_15 = arith.constant 0 : index
    %23 = vector.load %arg8[%c0_14, %c0_15] : memref<8x256xf32, #tpu.memory_space<vmem>>, vector<8x32xf32>
    tpu.vector_store %arg8[%c0_14, %c0_15], %22 {strides = array<i32>} : memref<8x256xf32, #tpu.memory_space<vmem>>, vector<8x32xf32>,
    %24 = vector.extract_strided_slice %0 {offsets = [0, 1], sizes = [8, 1], strides = [1, 1]} : vector<8x8xi32> to vector<8x1xi32>
    %25 = vector.broadcast %24 : vector<8x1xi32> to vector<8x128xi32>
    %26 = vector.broadcast %10 : vector<1x128xi32> to vector<8x128xi32>
    %27 = arith.cmpi eq, %25, %26 : vector<8x128xi32>
    %28 = arith.extui %27 : vector<8x128xi1> to vector<8x128xi32>
    %29 = arith.sitofp %28 : vector<8x128xi32> to vector<8x128xf32>
    %c0_16 = arith.constant 0 : index
    %c0_17 = arith.constant 0 : index
    %30 = vector.load %arg5[%c0_16, %c0_17] : memref<128x16xf32, #tpu.memory_space<vmem>>, vector<128x16xf32>
    %cst_18 = arith.constant dense<0.000000e+00> : vector<8x16xf32>
    %31 = tpu.matmul %29, %30, %cst_18 {dimension_numbers = #tpu.dot_dimension_numbers<[1], [0], [0], [1], [0, 0, 1, 1], [], []>} : vector<8x128xf32>, vector<128x16xf32>, vector<8x16xf32> -> vector<8x16xf32>
    %32 = vector.extract_strided_slice %9 {offsets = [0, 16], sizes = [8, 16], strides = [1, 1]} : vector<8x128xf32> to vector<8x16xf32>
    %33 = tpu.concatenate %31, %32 in 1 : vector<8x16xf32>, vector<8x16xf32> -> vector<8x32xf32>
    %c0_19 = arith.constant 0 : index
    %c32 = arith.constant 32 : index
    %34 = vector.load %arg8[%c0_19, %c32] : memref<8x256xf32, #tpu.memory_space<vmem>>, vector<8x32xf32>
    tpu.vector_store %arg8[%c0_19, %c32], %33 {strides = array<i32>} : memref<8x256xf32, #tpu.memory_space<vmem>>, vector<8x32xf32>,
    %35 = vector.extract_strided_slice %0 {offsets = [0, 2], sizes = [8, 1], strides = [1, 1]} : vector<8x8xi32> to vector<8x1xi32>
    %36 = vector.broadcast %35 : vector<8x1xi32> to vector<8x128xi32>
    %37 = vector.broadcast %10 : vector<1x128xi32> to vector<8x128xi32>
    %38 = arith.cmpi eq, %36, %37 : vector<8x128xi32>
    %39 = arith.extui %38 : vector<8x128xi1> to vector<8x128xi32>
    %40 = arith.sitofp %39 : vector<8x128xi32> to vector<8x128xf32>
    %c0_20 = arith.constant 0 : index
    %c0_21 = arith.constant 0 : index
    %41 = vector.load %arg5[%c0_20, %c0_21] : memref<128x16xf32, #tpu.memory_space<vmem>>, vector<128x16xf32>
    %cst_22 = arith.constant dense<0.000000e+00> : vector<8x16xf32>
    %42 = tpu.matmul %40, %41, %cst_22 {dimension_numbers = #tpu.dot_dimension_numbers<[1], [0], [0], [1], [0, 0, 1, 1], [], []>} : vector<8x128xf32>, vector<128x16xf32>, vector<8x16xf32> -> vector<8x16xf32>
    %43 = vector.extract_strided_slice %9 {offsets = [0, 32], sizes = [8, 16], strides = [1, 1]} : vector<8x128xf32> to vector<8x16xf32>
    %44 = tpu.concatenate %42, %43 in 1 : vector<8x16xf32>, vector<8x16xf32> -> vector<8x32xf32>
    %c0_23 = arith.constant 0 : index
    %c64 = arith.constant 64 : index
    %45 = vector.load %arg8[%c0_23, %c64] : memref<8x256xf32, #tpu.memory_space<vmem>>, vector<8x32xf32>
    tpu.vector_store %arg8[%c0_23, %c64], %44 {strides = array<i32>} : memref<8x256xf32, #tpu.memory_space<vmem>>, vector<8x32xf32>,
    %46 = vector.extract_strided_slice %0 {offsets = [0, 3], sizes = [8, 1], strides = [1, 1]} : vector<8x8xi32> to vector<8x1xi32>
    %47 = vector.broadcast %46 : vector<8x1xi32> to vector<8x128xi32>
    %48 = vector.broadcast %10 : vector<1x128xi32> to vector<8x128xi32>
    %49 = arith.cmpi eq, %47, %48 : vector<8x128xi32>
    %50 = arith.extui %49 : vector<8x128xi1> to vector<8x128xi32>
    %51 = arith.sitofp %50 : vector<8x128xi32> to vector<8x128xf32>
    %c0_24 = arith.constant 0 : index
    %c0_25 = arith.constant 0 : index
    %52 = vector.load %arg5[%c0_24, %c0_25] : memref<128x16xf32, #tpu.memory_space<vmem>>, vector<128x16xf32>
    %cst_26 = arith.constant dense<0.000000e+00> : vector<8x16xf32>
    %53 = tpu.matmul %51, %52, %cst_26 {dimension_numbers = #tpu.dot_dimension_numbers<[1], [0], [0], [1], [0, 0, 1, 1], [], []>} : vector<8x128xf32>, vector<128x16xf32>, vector<8x16xf32> -> vector<8x16xf32>
    %54 = vector.extract_strided_slice %9 {offsets = [0, 48], sizes = [8, 16], strides = [1, 1]} : vector<8x128xf32> to vector<8x16xf32>
    %55 = tpu.concatenate %53, %54 in 1 : vector<8x16xf32>, vector<8x16xf32> -> vector<8x32xf32>
    %c0_27 = arith.constant 0 : index
    %c96 = arith.constant 96 : index
    %56 = vector.load %arg8[%c0_27, %c96] : memref<8x256xf32, #tpu.memory_space<vmem>>, vector<8x32xf32>
    tpu.vector_store %arg8[%c0_27, %c96], %55 {strides = array<i32>} : memref<8x256xf32, #tpu.memory_space<vmem>>, vector<8x32xf32>,
    %57 = vector.extract_strided_slice %0 {offsets = [0, 4], sizes = [8, 1], strides = [1, 1]} : vector<8x8xi32> to vector<8x1xi32>
    %58 = vector.broadcast %57 : vector<8x1xi32> to vector<8x128xi32>
    %59 = vector.broadcast %10 : vector<1x128xi32> to vector<8x128xi32>
    %60 = arith.cmpi eq, %58, %59 : vector<8x128xi32>
    %61 = arith.extui %60 : vector<8x128xi1> to vector<8x128xi32>
    %62 = arith.sitofp %61 : vector<8x128xi32> to vector<8x128xf32>
    %c0_28 = arith.constant 0 : index
    %c0_29 = arith.constant 0 : index
    %63 = vector.load %arg5[%c0_28, %c0_29] : memref<128x16xf32, #tpu.memory_space<vmem>>, vector<128x16xf32>
    %cst_30 = arith.constant dense<0.000000e+00> : vector<8x16xf32>
    %64 = tpu.matmul %62, %63, %cst_30 {dimension_numbers = #tpu.dot_dimension_numbers<[1], [0], [0], [1], [0, 0, 1, 1], [], []>} : vector<8x128xf32>, vector<128x16xf32>, vector<8x16xf32> -> vector<8x16xf32>
    %65 = vector.extract_strided_slice %9 {offsets = [0, 64], sizes = [8, 16], strides = [1, 1]} : vector<8x128xf32> to vector<8x16xf32>
    %66 = tpu.concatenate %64, %65 in 1 : vector<8x16xf32>, vector<8x16xf32> -> vector<8x32xf32>
    %c0_31 = arith.constant 0 : index
    %c128 = arith.constant 128 : index
    %67 = vector.load %arg8[%c0_31, %c128] : memref<8x256xf32, #tpu.memory_space<vmem>>, vector<8x32xf32>
    tpu.vector_store %arg8[%c0_31, %c128], %66 {strides = array<i32>} : memref<8x256xf32, #tpu.memory_space<vmem>>, vector<8x32xf32>,
    %68 = vector.extract_strided_slice %0 {offsets = [0, 5], sizes = [8, 1], strides = [1, 1]} : vector<8x8xi32> to vector<8x1xi32>
    %69 = vector.broadcast %68 : vector<8x1xi32> to vector<8x128xi32>
    %70 = vector.broadcast %10 : vector<1x128xi32> to vector<8x128xi32>
    %71 = arith.cmpi eq, %69, %70 : vector<8x128xi32>
    %72 = arith.extui %71 : vector<8x128xi1> to vector<8x128xi32>
    %73 = arith.sitofp %72 : vector<8x128xi32> to vector<8x128xf32>
    %c0_32 = arith.constant 0 : index
    %c0_33 = arith.constant 0 : index
    %74 = vector.load %arg5[%c0_32, %c0_33] : memref<128x16xf32, #tpu.memory_space<vmem>>, vector<128x16xf32>
    %cst_34 = arith.constant dense<0.000000e+00> : vector<8x16xf32>
    %75 = tpu.matmul %73, %74, %cst_34 {dimension_numbers = #tpu.dot_dimension_numbers<[1], [0], [0], [1], [0, 0, 1, 1], [], []>} : vector<8x128xf32>, vector<128x16xf32>, vector<8x16xf32> -> vector<8x16xf32>
    %76 = vector.extract_strided_slice %9 {offsets = [0, 80], sizes = [8, 16], strides = [1, 1]} : vector<8x128xf32> to vector<8x16xf32>
    %77 = tpu.concatenate %75, %76 in 1 : vector<8x16xf32>, vector<8x16xf32> -> vector<8x32xf32>
    %c0_35 = arith.constant 0 : index
    %c160 = arith.constant 160 : index
    %78 = vector.load %arg8[%c0_35, %c160] : memref<8x256xf32, #tpu.memory_space<vmem>>, vector<8x32xf32>
    tpu.vector_store %arg8[%c0_35, %c160], %77 {strides = array<i32>} : memref<8x256xf32, #tpu.memory_space<vmem>>, vector<8x32xf32>,
    %79 = vector.extract_strided_slice %0 {offsets = [0, 6], sizes = [8, 1], strides = [1, 1]} : vector<8x8xi32> to vector<8x1xi32>
    %80 = vector.broadcast %79 : vector<8x1xi32> to vector<8x128xi32>
    %81 = vector.broadcast %10 : vector<1x128xi32> to vector<8x128xi32>
    %82 = arith.cmpi eq, %80, %81 : vector<8x128xi32>
    %83 = arith.extui %82 : vector<8x128xi1> to vector<8x128xi32>
    %84 = arith.sitofp %83 : vector<8x128xi32> to vector<8x128xf32>
    %c0_36 = arith.constant 0 : index
    %c0_37 = arith.constant 0 : index
    %85 = vector.load %arg5[%c0_36, %c0_37] : memref<128x16xf32, #tpu.memory_space<vmem>>, vector<128x16xf32>
    %cst_38 = arith.constant dense<0.000000e+00> : vector<8x16xf32>
    %86 = tpu.matmul %84, %85, %cst_38 {dimension_numbers = #tpu.dot_dimension_numbers<[1], [0], [0], [1], [0, 0, 1, 1], [], []>} : vector<8x128xf32>, vector<128x16xf32>, vector<8x16xf32> -> vector<8x16xf32>
    %87 = vector.extract_strided_slice %9 {offsets = [0, 96], sizes = [8, 16], strides = [1, 1]} : vector<8x128xf32> to vector<8x16xf32>
    %88 = tpu.concatenate %86, %87 in 1 : vector<8x16xf32>, vector<8x16xf32> -> vector<8x32xf32>
    %c0_39 = arith.constant 0 : index
    %c192 = arith.constant 192 : index
    %89 = vector.load %arg8[%c0_39, %c192] : memref<8x256xf32, #tpu.memory_space<vmem>>, vector<8x32xf32>
    tpu.vector_store %arg8[%c0_39, %c192], %88 {strides = array<i32>} : memref<8x256xf32, #tpu.memory_space<vmem>>, vector<8x32xf32>,
    %90 = vector.extract_strided_slice %0 {offsets = [0, 7], sizes = [8, 1], strides = [1, 1]} : vector<8x8xi32> to vector<8x1xi32>
    %91 = vector.broadcast %90 : vector<8x1xi32> to vector<8x128xi32>
    %92 = vector.broadcast %10 : vector<1x128xi32> to vector<8x128xi32>
    %93 = arith.cmpi eq, %91, %92 : vector<8x128xi32>
    %94 = arith.extui %93 : vector<8x128xi1> to vector<8x128xi32>
    %95 = arith.sitofp %94 : vector<8x128xi32> to vector<8x128xf32>
    %c0_40 = arith.constant 0 : index
    %c0_41 = arith.constant 0 : index
    %96 = vector.load %arg5[%c0_40, %c0_41] : memref<128x16xf32, #tpu.memory_space<vmem>>, vector<128x16xf32>
    %cst_42 = arith.constant dense<0.000000e+00> : vector<8x16xf32>
    %97 = tpu.matmul %95, %96, %cst_42 {dimension_numbers = #tpu.dot_dimension_numbers<[1], [0], [0], [1], [0, 0, 1, 1], [], []>} : vector<8x128xf32>, vector<128x16xf32>, vector<8x16xf32> -> vector<8x16xf32>
    %98 = vector.extract_strided_slice %9 {offsets = [0, 112], sizes = [8, 16], strides = [1, 1]} : vector<8x128xf32> to vector<8x16xf32>
    %99 = tpu.concatenate %97, %98 in 1 : vector<8x16xf32>, vector<8x16xf32> -> vector<8x32xf32>
    %c0_43 = arith.constant 0 : index
    %c224 = arith.constant 224 : index
    %100 = vector.load %arg8[%c0_43, %c224] : memref<8x256xf32, #tpu.memory_space<vmem>>, vector<8x32xf32>
    tpu.vector_store %arg8[%c0_43, %c224], %99 {strides = array<i32>} : memref<8x256xf32, #tpu.memory_space<vmem>>, vector<8x32xf32>,
    return
  }
  func.func @transform_0(%arg0: i32) -> (i32, i32) {
    %c0_i32 = arith.constant 0 : i32
    %c0_i32_0 = arith.constant 0 : i32
    return %arg0, %c0_i32 : i32, i32
  }
  func.func @transform_1(%arg0: i32) -> (i32, i32) {
    %c0_i32 = arith.constant 0 : i32
    %c0_i32_0 = arith.constant 0 : i32
    return %arg0, %c0_i32 : i32, i32
  }
  func.func @transform_2(%arg0: i32) -> (i32, i32) {
    %c0_i32 = arith.constant 0 : i32
    %c0_i32_0 = arith.constant 0 : i32
    return %arg0, %c0_i32 : i32, i32
  }
  func.func @transform_3(%arg0: i32) -> (i32, i32) {
    %c0_i32 = arith.constant 0 : i32
    %c0_i32_0 = arith.constant 0 : i32
    return %arg0, %c0_i32 : i32, i32
  }
  func.func @transform_4(%arg0: i32) -> (i32, i32) {
    %c0_i32 = arith.constant 0 : i32
    %c0_i32_0 = arith.constant 0 : i32
    %c0_i32_1 = arith.constant 0 : i32
    return %c0_i32, %c0_i32_0 : i32, i32
  }
  func.func @transform_5(%arg0: i32) -> (i32, i32) {
    %c0_i32 = arith.constant 0 : i32
    %c0_i32_0 = arith.constant 0 : i32
    %c0_i32_1 = arith.constant 0 : i32
    return %c0_i32, %c0_i32_0 : i32, i32
  }
  func.func @transform_6(%arg0: i32) -> (i32, i32) {
    %c0_i32 = arith.constant 0 : i32
    %c0_i32_0 = arith.constant 0 : i32
    %c0_i32_1 = arith.constant 0 : i32
    return %c0_i32, %c0_i32_0 : i32, i32
  }
  func.func @transform_7(%arg0: i32) -> (i32, i32) {
    %c0_i32 = arith.constant 0 : i32
    %c0_i32_0 = arith.constant 0 : i32
    return %arg0, %c0_i32 : i32, i32
  }
}

</mosaic_0001>

<llo_original>
// kernel: tpu_custom_call.1
$region0: #{tpu_custom_call.1}
  #allocation0 [shape = 'u32[]', space=smem, size = 0x4, offset = 0x4, fixed_abs, tag = 'smem constant byte address 0x4 - core index']
  #allocation1 [shape = 'u32[72,128]{1,0:T(1,128)}', space=vmem, size = 0x9000, scoped, tag = 'internal scratch']
  %s0 = inlined_call_operand.vmem [shape: s32[16,8], index: 0, kind: input, shape index: {}]
  %s1 = inlined_call_operand.vmem [shape: f32[16,8], index: 1, kind: input, shape index: {}]
  %s2 = inlined_call_operand.vmem [shape: f32[16,8], index: 2, kind: input, shape index: {}]
  %s3 = inlined_call_operand.vmem [shape: f32[16,32], index: 3, kind: input, shape index: {}]
  %s4 = inlined_call_operand.vmem [shape: f32[128,16], index: 4, kind: input, shape index: {}]
  %s5 = inlined_call_operand.vmem [shape: f32[16,128], index: 5, kind: input, shape index: {}]
  %s6 = inlined_call_operand.vmem [shape: f32[1,128], index: 6, kind: input, shape index: {}]
  %s7 = inlined_call_operand.hbm [shape: f32[16,256], index: 7, kind: output, shape index: {}]
  %s8 = sld [smem:[#allocation0]]
  $region61: #{tpu_custom_call.1} parent=0
    _
  %s10 = ssub.s32 1, %s8
  %s11 = scalar_select 0, %s10, %s8
  $region1: #{tpu_custom_call.1} parent=0
    #allocation2 [shape = 'u8[16384]{0}', space=vmem, size = 0x4000, scoped, tag = 'output window, operand 0']
    #allocation3 [shape = 's32[2]{0}', space=sflag, size = 0x8, scoped, tag = 'scoped memory for tpu_custom_call.1']
    %12 = vsyncpa [#allocation3], 0
    %s13 = scalar_lea.sflag [#allocation3], 1
    %14 = vsyncpa %s13, 0
    loop: start=0, step=1, limit=4
    $region2: #{tpu_custom_call.1} parent=1 // loop_pre_header
      _
    $region3: #{tpu_custom_call.1} parent=1 // loop_header
      %s16 = sphi 0, %s20
      %p17 = scmp.ge.s32.totalorder %s16, 4
      %s26 = sphi 0, %s28
      %s29 = sphi 0, %s26
      %s30 = sphi 0, %s29
      %s46 = sphi 0, %s30
      %s52 = sphi 0, %s54
      %s55 = sphi 0, %s52
      %s56 = sphi 0, %s55
      %s72 = sphi 0, %s56
      %s78 = sphi 0, %s80
      %s81 = sphi 0, %s78
      %s82 = sphi 0, %s81
      %s98 = sphi 0, %s82
      %s104 = sphi 0, %s106
      %s107 = sphi 0, %s104
      %s108 = sphi 0, %s107
      %s124 = sphi 0, %s108
      %s128 = sphi 0, %s128
      %s130 = sphi 0, %s128
      %s131 = sphi 0, %s130
      %s145 = sphi 0, %s131
      %s149 = sphi 0, %s149
      %s151 = sphi 0, %s149
      %s152 = sphi 0, %s151
      %s166 = sphi 0, %s152
      %s170 = sphi 0, %s170
      %s172 = sphi 0, %s170
      %s173 = sphi 0, %s172
      %s187 = sphi 0, %s173
      %s193 = sphi 0, %s195
      %s196 = sphi 0, %s193
      %s197 = sphi 0, %s196
      %s213 = sphi 0, %s197
    $region4: #{tpu_custom_call.1} parent=1 // loop_header_branch
      %19 = sbr.rel (%p17) target = $region8
    $region5: #{tpu_custom_call.1} parent=1 // loop_body
      %s21 = ssub.s32 %s16, 1
      %s22 = ssub.s32 %s16, 2
      %s23 = sadd.s32 %s16, 1
      %s24 = ssub.s32 %s16, %s23
      %p25 = scmp.eq.s32.totalorder %s24, 0
      %s27 = sadd.s32 %s26, 1
      %s28 = scalar_select %p25, %s26, %s27
      %p31 = pneg %p25
      %p32 = scmp.eq.s32.totalorder %s16, 1
      %p33 = por %p31, %p32
      %p34 = scmp.ne.s32.totalorder %s26, %s29
      %p35 = scmp.eq.s32.totalorder %s16, 0
      %p36 = por %p34, %p35
      %p37 = scmp.ne.s32.totalorder %s26, %s29
      %p38 = scmp.eq.s32.totalorder %s21, 1
      %p39 = por %p37, %p38
      %p40 = scmp.ne.s32.totalorder %s29, %s30
      %p41 = scmp.eq.s32.totalorder %s21, 0
      %p42 = por %p40, %p41
      %p43 = scmp.ne.s32.totalorder %s29, %s30
      %p44 = scmp.eq.s32.totalorder %s22, 1
      %p45 = por %p43, %p44
      %p47 = scmp.ne.s32.totalorder %s30, %s46
      %p48 = scmp.eq.s32.totalorder %s22, 0
      %p49 = por %p47, %p48
      %s50 = ssub.s32 %s16, %s23
      %p51 = scmp.eq.s32.totalorder %s50, 0
      %s53 = sadd.s32 %s52, 1
      %s54 = scalar_select %p51, %s52, %s53
      %p57 = pneg %p51
      %p58 = scmp.eq.s32.totalorder %s16, 1
      %p59 = por %p57, %p58
      %p60 = scmp.ne.s32.totalorder %s52, %s55
      %p61 = scmp.eq.s32.totalorder %s16, 0
      %p62 = por %p60, %p61
      %p63 = scmp.ne.s32.totalorder %s52, %s55
      %p64 = scmp.eq.s32.totalorder %s21, 1
      %p65 = por %p63, %p64
      %p66 = scmp.ne.s32.totalorder %s55, %s56
      %p67 = scmp.eq.s32.totalorder %s21, 0
      %p68 = por %p66, %p67
      %p69 = scmp.ne.s32.totalorder %s55, %s56
      %p70 = scmp.eq.s32.totalorder %s22, 1
      %p71 = por %p69, %p70
      %p73 = scmp.ne.s32.totalorder %s56, %s72
      %p74 = scmp.eq.s32.totalorder %s22, 0
      %p75 = por %p73, %p74
      %s76 = ssub.s32 %s16, %s23
      %p77 = scmp.eq.s32.totalorder %s76, 0
      %s79 = sadd.s32 %s78, 1
      %s80 = scalar_select %p77, %s78, %s79
      %p83 = pneg %p77
      %p84 = scmp.eq.s32.totalorder %s16, 1
      %p85 = por %p83, %p84
      %p86 = scmp.ne.s32.totalorder %s78, %s81
      %p87 = scmp.eq.s32.totalorder %s16, 0
      %p88 = por %p86, %p87
      %p89 = scmp.ne.s32.totalorder %s78, %s81
      %p90 = scmp.eq.s32.totalorder %s21, 1
      %p91 = por %p89, %p90
      %p92 = scmp.ne.s32.totalorder %s81, %s82
      %p93 = scmp.eq.s32.totalorder %s21, 0
      %p94 = por %p92, %p93
      %p95 = scmp.ne.s32.totalorder %s81, %s82
      %p96 = scmp.eq.s32.totalorder %s22, 1
      %p97 = por %p95, %p96
      %p99 = scmp.ne.s32.totalorder %s82, %s98
      %p100 = scmp.eq.s32.totalorder %s22, 0
      %p101 = por %p99, %p100
      %s102 = ssub.s32 %s16, %s23
      %p103 = scmp.eq.s32.totalorder %s102, 0
      %s105 = sadd.s32 %s104, 1
      %s106 = scalar_select %p103, %s104, %s105
      %p109 = pneg %p103
      %p110 = scmp.eq.s32.totalorder %s16, 1
      %p111 = por %p109, %p110
      %p112 = scmp.ne.s32.totalorder %s104, %s107
      %p113 = scmp.eq.s32.totalorder %s16, 0
      %p114 = por %p112, %p113
      %p115 = scmp.ne.s32.totalorder %s104, %s107
      %p116 = scmp.eq.s32.totalorder %s21, 1
      %p117 = por %p115, %p116
      %p118 = scmp.ne.s32.totalorder %s107, %s108
      %p119 = scmp.eq.s32.totalorder %s21, 0
      %p120 = por %p118, %p119
      %p121 = scmp.ne.s32.totalorder %s107, %s108
      %p122 = scmp.eq.s32.totalorder %s22, 1
      %p123 = por %p121, %p122
      %p125 = scmp.ne.s32.totalorder %s108, %s124
      %p126 = scmp.eq.s32.totalorder %s22, 0
      %p127 = por %p125, %p126
      %s129 = sadd.s32 %s128, 1
      %p132 = scmp.eq.s32.totalorder %s16, 1
      %p133 = scmp.ne.s32.totalorder %s128, %s130
      %p134 = scmp.eq.s32.totalorder %s16, 0
      %p135 = por %p133, %p134
      %p136 = scmp.ne.s32.totalorder %s128, %s130
      %p137 = scmp.eq.s32.totalorder %s21, 1
      %p138 = por %p136, %p137
      %p139 = scmp.ne.s32.totalorder %s130, %s131
      %p140 = scmp.eq.s32.totalorder %s21, 0
      %p141 = por %p139, %p140
      %p142 = scmp.ne.s32.totalorder %s130, %s131
      %p143 = scmp.eq.s32.totalorder %s22, 1
      %p144 = por %p142, %p143
      %p146 = scmp.ne.s32.totalorder %s131, %s145
      %p147 = scmp.eq.s32.totalorder %s22, 0
      %p148 = por %p146, %p147
      %s150 = sadd.s32 %s149, 1
      %p153 = scmp.eq.s32.totalorder %s16, 1
      %p154 = scmp.ne.s32.totalorder %s149, %s151
      %p155 = scmp.eq.s32.totalorder %s16, 0
      %p156 = por %p154, %p155
      %p157 = scmp.ne.s32.totalorder %s149, %s151
      %p158 = scmp.eq.s32.totalorder %s21, 1
      %p159 = por %p157, %p158
      %p160 = scmp.ne.s32.totalorder %s151, %s152
      %p161 = scmp.eq.s32.totalorder %s21, 0
      %p162 = por %p160, %p161
      %p163 = scmp.ne.s32.totalorder %s151, %s152
      %p164 = scmp.eq.s32.totalorder %s22, 1
      %p165 = por %p163, %p164
      %p167 = scmp.ne.s32.totalorder %s152, %s166
      %p168 = scmp.eq.s32.totalorder %s22, 0
      %p169 = por %p167, %p168
      %s171 = sadd.s32 %s170, 1
      %p174 = scmp.eq.s32.totalorder %s16, 1
      %p175 = scmp.ne.s32.totalorder %s170, %s172
      %p176 = scmp.eq.s32.totalorder %s16, 0
      %p177 = por %p175, %p176
      %p178 = scmp.ne.s32.totalorder %s170, %s172
      %p179 = scmp.eq.s32.totalorder %s21, 1
      %p180 = por %p178, %p179
      %p181 = scmp.ne.s32.totalorder %s172, %s173
      %p182 = scmp.eq.s32.totalorder %s21, 0
      %p183 = por %p181, %p182
      %p184 = scmp.ne.s32.totalorder %s172, %s173
      %p185 = scmp.eq.s32.totalorder %s22, 1
      %p186 = por %p184, %p185
      %p188 = scmp.ne.s32.totalorder %s173, %s187
      %p189 = scmp.eq.s32.totalorder %s22, 0
      %p190 = por %p188, %p189
      %s191 = ssub.s32 %s16, %s23
      %p192 = scmp.eq.s32.totalorder %s191, 0
      %s194 = sadd.s32 %s193, 1
      %s195 = scalar_select %p192, %s193, %s194
      %p198 = pneg %p192
      %p199 = scmp.eq.s32.totalorder %s16, 1
      %p200 = por %p198, %p199
      %p201 = scmp.ne.s32.totalorder %s193, %s196
      %p202 = scmp.eq.s32.totalorder %s16, 0
      %p203 = por %p201, %p202
      %p204 = scmp.ne.s32.totalorder %s193, %s196
      %p205 = scmp.eq.s32.totalorder %s21, 1
      %p206 = por %p204, %p205
      %p207 = scmp.ne.s32.totalorder %s196, %s197
      %p208 = scmp.eq.s32.totalorder %s21, 0
      %p209 = por %p207, %p208
      %p210 = scmp.ne.s32.totalorder %s196, %s197
      %p211 = scmp.eq.s32.totalorder %s22, 1
      %p212 = por %p210, %p211
      %p214 = scmp.ne.s32.totalorder %s197, %s213
      %p215 = scmp.eq.s32.totalorder %s22, 0
      %p216 = por %p214, %p215
      %p217 = scmp.le.s32.totalorder 1, %s16
      %p218 = scmp.lt.s32.totalorder %s16, 3
      %p219 = pnand %p217, %p218
      %p220 = pneg %p219
      // Predicated region
      $region9: #{tpu_custom_call.1} parent=5 // pred_check
        _
      $region10: #{tpu_custom_call.1} parent=5 // pred_check_branch
        %222 = sbr.rel (%p219) target = $region12
      $region11: #{tpu_custom_call.1} parent=5 // pred_region
        %s223 = ssub.s32 %s16, 1
        // Predicated region
        $region13: #{tpu_custom_call.1} parent=11 // pred_check
          %p224 = pneg %p141
        $region14: #{tpu_custom_call.1} parent=11 // pred_check_branch
          %226 = sbr.rel (%p224) target = $region16
        $region15: #{tpu_custom_call.1} parent=11 // pred_region
          _
        $region16: #{tpu_custom_call.1} parent=11 // pred_fallthru
          _
        // Predicated region
        $region17: #{tpu_custom_call.1} parent=11 // pred_check
          %p227 = pneg %p162
        $region18: #{tpu_custom_call.1} parent=11 // pred_check_branch
          %229 = sbr.rel (%p227) target = $region20
        $region19: #{tpu_custom_call.1} parent=11 // pred_region
          _
        $region20: #{tpu_custom_call.1} parent=11 // pred_fallthru
          _
        // Predicated region
        $region21: #{tpu_custom_call.1} parent=11 // pred_check
          %p230 = pneg %p183
        $region22: #{tpu_custom_call.1} parent=11 // pred_check_branch
          %232 = sbr.rel (%p230) target = $region24
        $region23: #{tpu_custom_call.1} parent=11 // pred_region
          _
        $region24: #{tpu_custom_call.1} parent=11 // pred_fallthru
          _
      $region12: #{tpu_custom_call.1} parent=5 // pred_fallthru
        _
      %p233 = scmp.lt.s32.totalorder %s16, 2
      // Predicated region
      $region25: #{tpu_custom_call.1} parent=5 // pred_check
        %p234 = pneg %p233
      $region26: #{tpu_custom_call.1} parent=5 // pred_check_branch
        %236 = sbr.rel (%p234) target = $region28
      $region27: #{tpu_custom_call.1} parent=5 // pred_region
        // Predicated region
        $region29: #{tpu_custom_call.1} parent=27 // pred_check
          %p237 = pneg %p36
        $region30: #{tpu_custom_call.1} parent=27 // pred_check_branch
          %239 = sbr.rel (%p237) target = $region32
        $region31: #{tpu_custom_call.1} parent=27 // pred_region
          %p240 = scmp.lt.s32.totalorder %s16, 1
          %s241 = scalar_select %p240, %s16, 1
          %s242 = smul.addr %s241, 8
          %s243 = scalar_lea.vmem %s0, %s242
        $region32: #{tpu_custom_call.1} parent=27 // pred_fallthru
          _
        // Predicated region
        $region33: #{tpu_custom_call.1} parent=27 // pred_check
          %p244 = pneg %p62
        $region34: #{tpu_custom_call.1} parent=27 // pred_check_branch
          %246 = sbr.rel (%p244) target = $region36
        $region35: #{tpu_custom_call.1} parent=27 // pred_region
          %p247 = scmp.lt.s32.totalorder %s16, 1
          %s248 = scalar_select %p247, %s16, 1
          %s249 = smul.addr %s248, 8
          %s250 = scalar_lea.vmem %s1, %s249
        $region36: #{tpu_custom_call.1} parent=27 // pred_fallthru
          _
        // Predicated region
        $region37: #{tpu_custom_call.1} parent=27 // pred_check
          %p251 = pneg %p88
        $region38: #{tpu_custom_call.1} parent=27 // pred_check_branch
          %253 = sbr.rel (%p251) target = $region40
        $region39: #{tpu_custom_call.1} parent=27 // pred_region
          %p254 = scmp.lt.s32.totalorder %s16, 1
          %s255 = scalar_select %p254, %s16, 1
          %s256 = smul.addr %s255, 8
          %s257 = scalar_lea.vmem %s2, %s256
        $region40: #{tpu_custom_call.1} parent=27 // pred_fallthru
          _
        // Predicated region
        $region41: #{tpu_custom_call.1} parent=27 // pred_check
          %p258 = pneg %p114
        $region42: #{tpu_custom_call.1} parent=27 // pred_check_branch
          %260 = sbr.rel (%p258) target = $region44
        $region43: #{tpu_custom_call.1} parent=27 // pred_region
          %p261 = scmp.lt.s32.totalorder %s16, 1
          %s262 = scalar_select %p261, %s16, 1
          %s263 = smul.addr %s262, 8
          %s264 = scalar_lea.vmem %s3, %s263
        $region44: #{tpu_custom_call.1} parent=27 // pred_fallthru
          _
      $region28: #{tpu_custom_call.1} parent=5 // pred_fallthru
        _
      %p265 = scmp.le.s32.totalorder 1, %s16
      %p266 = scmp.lt.s32.totalorder %s16, 3
      %p267 = pnand %p265, %p266
      %p268 = pneg %p267
      // Predicated region
      $region45: #{tpu_custom_call.1} parent=5 // pred_check
        _
      $region46: #{tpu_custom_call.1} parent=5 // pred_check_branch
        %270 = sbr.rel (%p267) target = $region48
      $region47: #{tpu_custom_call.1} parent=5 // pred_region
        %s271 = ssub.s32 %s16, 1
        %p272 = scmp.lt.s32.totalorder %s21, 1
        %s273 = scalar_select %p272, %s21, 1
        %s274 = smul.addr %s273, 8
        %s275 = scalar_lea.vmem %s0, %s274
        %p276 = pneg %p42
        %p277 = pneg %p39
        %p278 = scmp.lt.s32.totalorder %s21, 1
        %s279 = scalar_select %p278, %s21, 1
        %s280 = smul.addr %s279, 8
        %s281 = scalar_lea.vmem %s1, %s280
        %p282 = pneg %p68
        %p283 = pneg %p65
        %p284 = scmp.lt.s32.totalorder %s21, 1
        %s285 = scalar_select %p284, %s21, 1
        %s286 = smul.addr %s285, 8
        %s287 = scalar_lea.vmem %s2, %s286
        %p288 = pneg %p94
        %p289 = pneg %p91
        %p290 = scmp.lt.s32.totalorder %s21, 1
        %s291 = scalar_select %p290, %s21, 1
        %s292 = smul.addr %s291, 8
        %s293 = scalar_lea.vmem %s3, %s292
        %p294 = pneg %p120
        %p295 = pneg %p117
        %p296 = pneg %p141
        %p297 = pneg %p138
        %p298 = pneg %p162
        %p299 = pneg %p159
        %p300 = pneg %p183
        %p301 = pneg %p180
        %p302 = pneg %p209
        %p303 = pneg %p206
        %s304 = sand.u32 %s196, 1
        %s305 = scalar_lea.sflag [#allocation3], %s304
        %s306 = sand.u32 %s196, 1
        %s307 = smul.addr %s306, 16
        %s308 = scalar_lea.vmem [#allocation2], %s307
        %p309 = scmp.lt.s32.totalorder %s21, 1
        %s310 = scalar_select %p309, %s21, 1
        %s311 = smul.addr %s310, 8
        %s312 = scalar_lea.vmem %s0, %s311
        %p313 = scmp.lt.s32.totalorder %s21, 1
        %s314 = scalar_select %p313, %s21, 1
        %s315 = smul.addr %s314, 8
        %s316 = scalar_lea.vmem %s1, %s315
        %p317 = scmp.lt.s32.totalorder %s21, 1
        %s318 = scalar_select %p317, %s21, 1
        %s319 = smul.addr %s318, 8
        %s320 = scalar_lea.vmem %s2, %s319
        %p321 = scmp.lt.s32.totalorder %s21, 1
        %s322 = scalar_select %p321, %s21, 1
        %s323 = smul.addr %s322, 8
        %s324 = scalar_lea.vmem %s3, %s323
        %v325 = vld [vmem:[%s312] sm:$0xff]
        %v326 = vld [vmem:[%s316] sm:$0xff]
        %v327 = vld [vmem:[%s320] sm:$0xff]
        %329 = vrot.lane.b32.xlu0 %v327, 8
        %v330 = vpop.permute.xlu0 %329
        %vm332 = vcmask 64512
        %v333 = vsel %vm332, %v326, %v330
        %v334 = vld [vmem:[%s5] sm:$0xff]
        %v335 = vld [vmem:[%s5 + $0x8] sm:$0xff]
        %v336 = vld [vmem:[%s6] sm:$0x1]
        %v338 = vperm.slane %v336, 0
        %vm340 = vcmask 130048
        %v342 = vsel %vm340, %v333, 0
        %344 = vmatpush.msra.mxu0 0.0
        %345 = vmatpush.msra.mxu0 0.0
        %346 = vmatpush.msra.mxu0 0.0
        %347 = vmatpush.msra.mxu0 0.0
        %348 = vmatpush.msra.mxu0 0.0
        %349 = vmatpush.msra.mxu0 0.0
        %350 = vmatpush.msra.mxu0 0.0
        %351 = vmatpush.msra.mxu0 0.0
        %352 = vmatpush.msra.mxu0 0.0
        %353 = vmatpush.msra.mxu0 0.0
        %354 = vmatpush.msra.mxu0 0.0
        %355 = vmatpush.msra.mxu0 0.0
        %356 = vmatpush.msra.mxu0 0.0
        %357 = vmatpush.msra.mxu0 0.0
        %358 = vmatpush.msra.mxu0 %v335
        %359 = vmatpush.msra.mxu0 %v334
        %360 = vmatmul.f32.gmra.mxu0 %v342
        %v361 = vpop.f32.mrf.mxu0
        %v362 = vadd.f32 %v338, %v361
        %363 = vdwg.mxu0
        %v364 = vand.u32 2147483647, %v362
        %vm365 = vcmp.le.f32.partialorder %v364, 0.7853982
        %vm366 = vcmp.lt.s32.totalorder %v362, 0
        %v367 = vand.u32 %v362, 2139095040
        %v368 = vshrl.u32 %v367, 23
        %v369 = vsub.s32 %v368, 127
        %v370 = vand.u32 2147483647, %v362
        %v371 = vand.u32 %v370, 8388607
        %v372 = vor.u32 %v371, 8388608
        %v373 = vsub.s32 0, %v372
        %v374 = vadd.s32 %v369, 1
        %vm375 = vcmp.gt.s32.totalorder %v374, 0
        %v376 = vsel %vm375, %v374, 0
        %v377 = vshrl.u32 %v376, 5
        %v378 = vand.u32 %v376, 31
        %v379 = vsub.s32 32, %v378
        %v380 = vshrl.u32 683565275, %v379
        %v381 = vshll.u32 683565275, %v378
        %v382 = vshrl.u32 2475754826, %v379
        %v383 = vor.u32 %v381, %v382
        %v384 = vshll.u32 2475754826, %v378
        %v385 = vshrl.u32 2131351028, %v379
        %v386 = vor.u32 %v384, %v385
        %v387 = vshll.u32 2131351028, %v378
        %v388 = vshrl.u32 2102212464, %v379
        %v389 = vor.u32 %v387, %v388
        %v390 = vshll.u32 2102212464, %v378
        %v391 = vshrl.u32 920167782, %v379
        %v392 = vor.u32 %v390, %v391
        %v393 = vshll.u32 920167782, %v378
        %v394 = vshrl.u32 1326507024, %v379
        %v395 = vor.u32 %v393, %v394
        %vm396 = vcmp.lt.s32.totalorder %v377, 1
        %vm397 = vcmp.lt.s32.totalorder %v377, 2
        %vm398 = vcmp.lt.s32.totalorder %v377, 3
        %vm399 = vcmp.lt.s32.totalorder %v377, 4
        %v400 = vsel %vm396, %v380, %v383
        %v401 = vsel %vm399, %v389, 2102212464
        %v402 = vsel %vm398, %v386, %v401
        %v403 = vsel %vm397, %v400, %v402
        %v404 = vsel %vm396, %v383, %v386
        %v405 = vsel %vm399, %v392, 920167782
        %v406 = vsel %vm398, %v389, %v405
        %v407 = vsel %vm397, %v404, %v406
        %v408 = vsel %vm396, %v386, %v389
        %v409 = vsel %vm399, %v395, 1326507024
        %v410 = vsel %vm398, %v392, %v409
        %v411 = vsel %vm397, %v408, %v410
        %v412 = vshll.u32 %v372, 8
        %v413 = vand.u32 %v412, 65535
        %v414 = vshrl.u32 %v412, 16
        %v415 = vand.u32 %v411, 65535
        %v416 = vshrl.u32 %v411, 16
        %v417 = vmul.u32 %v413, %v415
        %v418 = vmul.u32 %v413, %v416
        %v419 = vmul.u32 %v414, %v415
        %v420 = vmul.u32 %v414, %v416
        %v421 = vshll.u32 %v418, 16
        %v422 = vshrl.u32 %v418, 16
        %v423 = vshll.u32 %v419, 16
        %v424 = vshrl.u32 %v419, 16
        %vm425 = vc.u32 %v417, %v421
        %v426 = vsel %vm425, 1, 0
        %v427 = vadd.s32 %v417, %v421
        %v428 = vadd.s32 %v420, %v426
        %vm429 = vc.u32 %v427, %v423
        %v430 = vsel %vm429, 1, 0
        %v431 = vadd.s32 %v427, %v423
        %v432 = vadd.s32 %v428, %v430
        %v433 = vadd.s32 %v432, %v422
        %v434 = vadd.s32 %v433, %v424
        %v435 = vand.u32 %v412, 65535
        %v436 = vshrl.u32 %v412, 16
        %v437 = vand.u32 %v407, 65535
        %v438 = vshrl.u32 %v407, 16
        %v439 = vmul.u32 %v435, %v437
        %v440 = vmul.u32 %v435, %v438
        %v441 = vmul.u32 %v436, %v437
        %v442 = vmul.u32 %v436, %v438
        %v443 = vshll.u32 %v440, 16
        %v444 = vshrl.u32 %v440, 16
        %v445 = vshll.u32 %v441, 16
        %v446 = vshrl.u32 %v441, 16
        %vm447 = vc.u32 %v439, %v443
        %v448 = vsel %vm447, 1, 0
        %v449 = vadd.s32 %v439, %v443
        %v450 = vadd.s32 %v442, %v448
        %vm451 = vc.u32 %v449, %v445
        %v452 = vsel %vm451, 1, 0
        %v453 = vadd.s32 %v449, %v445
        %v454 = vadd.s32 %v450, %v452
        %v455 = vadd.s32 %v454, %v444
        %v456 = vadd.s32 %v455, %v446
        %v457 = vmul.u32 %v412, %v403
        %v458 = vadd.s32 %v434, %v453
        %vm459 = vc.u32 %v434, %v453
        %v460 = vadd.s32 %v456, 1
        %v461 = vsel %vm459, %v460, %v456
        %v462 = vadd.s32 %v457, %v461
        %v463 = vadd.s32 %v462, 536870912
        %v464 = vshrl.u32 %v463, 30
        %v465 = vshll.u32 %v464, 30
        %v466 = vsub.s32 %v462, %v465
        %vm467 = vcmp.lt.s32.totalorder %v466, 0
        %v468 = vsub.s32 0, %v466
        %v469 = vsel %vm467, %v468, %v466
        %v470 = vclz %v469
        %v471 = vsub.s32 %v470, 2
        %vm472 = vcmp.gt.s32.totalorder 0, %v471
        %v473 = vsel %vm472, 0, %v471
        %v474 = vsub.s32 32, %v473
        %v475 = vshll.u32 %v466, %v473
        %v476 = vshrl.u32 %v458, %v474
        %v477 = vor.u32 %v475, %v476
        %v478 = vsub.s32 4294967266, %v473
        %v479 = vadd.s32 %v478, 127
        %v480 = vshll.u32 %v479, 23
        %v481 = vor.u32 4788187, %v480
        %v482 = vand.u32 2147483647, %v481
        %v484 = vcvt.s32.f32 %v477
        %v485 = vmul.f32 %v484, %v482
        %v486 = vxor.u32 %v485, 2147483648
        %v487 = vsel %vm366, %v486, %v485
        %v488 = vsub.s32 4, %v464
        %v489 = vsel %vm366, %v488, %v464
        %v490 = vsel %vm365, %v362, %v487
        %v491 = vsel %vm365, 0, %v489
        %v492 = vmul.f32 %v490, %v490
        %v493 = vmul.f32 %v492, -0.001358992
        %v494 = vadd.f32 %v493, 0.041655596
        %v495 = vmul.f32 %v492, %v494
        %v496 = vadd.f32 %v495, -0.4999988
        %v497 = vmul.f32 %v492, %v496
        %v498 = vadd.f32 1.0, %v497
        %v499 = vmul.f32 %v490, %v490
        %v500 = vmul.f32 %v499, -0.00019511016
        %v501 = vadd.f32 %v500, 0.008332121
        %v502 = vmul.f32 %v499, %v501
        %v503 = vadd.f32 %v502, -0.16666654
        %v504 = vmul.f32 %v499, %v503
        %v505 = vadd.f32 %v504, 1.0
        %v506 = vmul.f32 %v505, %v490
        %vm507 = vweird.f32 %v362
        %v508 = vadd.s32 %v491, 3
        %v509 = vand.u32 %v508, 3
        %vm510 = vcmp.lt.s32.totalorder %v509, 2
        %vm511 = vcmp.eq.s32.totalorder %v509, 0
        %v512 = vxor.u32 %v506, 2147483648
        %v513 = vsel %vm511, %v498, %v512
        %vm514 = vcmp.eq.s32.totalorder %v509, 2
        %v515 = vxor.u32 %v498, 2147483648
        %v516 = vsel %vm514, %v515, %v506
        %v517 = vsel %vm510, %v513, %v516
        %v518 = vsel %vm507, nan, %v517
        %v519 = vlaneseq
        %v520 = vand.u32 %v519, 127
        %521 = vset.pattern.permute.xlu0 0
        %522 = vperm.xlu0 %521, %v325
        %v523 = vpop.permute.xlu0 %522
        %vm524 = vcmp.eq.s32.totalorder %v523, %v520
        %v525 = vsel %vm524, 1, 0
        %v526 = vcvt.s32.f32 %v525
        %v527 = vld [vmem:[%s4] sm:$0xff]
        %v528 = vld [vmem:[%s4 + $0x8] sm:$0xff]
        %v529 = vld [vmem:[%s4 + $0x10] sm:$0xff]
        %v530 = vld [vmem:[%s4 + $0x18] sm:$0xff]
        %v531 = vld [vmem:[%s4 + $0x20] sm:$0xff]
        %v532 = vld [vmem:[%s4 + $0x28] sm:$0xff]
        %v533 = vld [vmem:[%s4 + $0x30] sm:$0xff]
        %v534 = vld [vmem:[%s4 + $0x38] sm:$0xff]
        %v535 = vld [vmem:[%s4 + $0x40] sm:$0xff]
        %v536 = vld [vmem:[%s4 + $0x48] sm:$0xff]
        %v537 = vld [vmem:[%s4 + $0x50] sm:$0xff]
        %v538 = vld [vmem:[%s4 + $0x58] sm:$0xff]
        %v539 = vld [vmem:[%s4 + $0x60] sm:$0xff]
        %v540 = vld [vmem:[%s4 + $0x68] sm:$0xff]
        %v541 = vld [vmem:[%s4 + $0x70] sm:$0xff]
        %v542 = vld [vmem:[%s4 + $0x78] sm:$0xff]
        %543 = vmatpush.msra.mxu0 %v542
        %544 = vmatpush.msra.mxu0 %v541
        %545 = vmatpush.msra.mxu0 %v540
        %546 = vmatpush.msra.mxu0 %v539
        %547 = vmatpush.msra.mxu0 %v538
        %548 = vmatpush.msra.mxu0 %v537
        %549 = vmatpush.msra.mxu0 %v536
        %550 = vmatpush.msra.mxu0 %v535
        %551 = vmatpush.msra.mxu0 %v534
        %552 = vmatpush.msra.mxu0 %v533
        %553 = vmatpush.msra.mxu0 %v532
        %554 = vmatpush.msra.mxu0 %v531
        %555 = vmatpush.msra.mxu0 %v530
        %556 = vmatpush.msra.mxu0 %v529
        %557 = vmatpush.msra.mxu0 %v528
        %558 = vmatpush.msra.mxu0 %v527
        %559 = vmatmul.f32.gmra.mxu0 %v526
        %v560 = vpop.f32.mrf.mxu0
        %v561 = vadd.f32 0.0, %v560
        %562 = vdwg.mxu0
        %564 = vrot.lane.b32.xlu0 %v518, 16
        %v565 = vpop.permute.xlu0 %564
        %v567 = vsel %vm340, %v561, %v565
        %v568 = vld [vmem:[%s324] sm:$0xff]
        %v569 = vadd.f32 %v567, %v568
        %vm570 = vcmask 261120
        %571 = vst.msk [vmem:[%s308] sm:$0xff] %vm570, %v569
        %572 = vset.pattern.permute.xlu0 1
        %573 = vperm.xlu0 %572, %v325
        %v574 = vpop.permute.xlu0 %573
        %vm575 = vcmp.eq.s32.totalorder %v574, %v520
        %v576 = vsel %vm575, 1, 0
        %v577 = vcvt.s32.f32 %v576
        %v578 = vld [vmem:[%s4] sm:$0xff]
        %v579 = vld [vmem:[%s4 + $0x8] sm:$0xff]
        %v580 = vld [vmem:[%s4 + $0x10] sm:$0xff]
        %v581 = vld [vmem:[%s4 + $0x18] sm:$0xff]
        %v582 = vld [vmem:[%s4 + $0x20] sm:$0xff]
        %v583 = vld [vmem:[%s4 + $0x28] sm:$0xff]
        %v584 = vld [vmem:[%s4 + $0x30] sm:$0xff]
        %v585 = vld [vmem:[%s4 + $0x38] sm:$0xff]
        %v586 = vld [vmem:[%s4 + $0x40] sm:$0xff]
        %v587 = vld [vmem:[%s4 + $0x48] sm:$0xff]
        %v588 = vld [vmem:[%s4 + $0x50] sm:$0xff]
        %v589 = vld [vmem:[%s4 + $0x58] sm:$0xff]
        %v590 = vld [vmem:[%s4 + $0x60] sm:$0xff]
        %v591 = vld [vmem:[%s4 + $0x68] sm:$0xff]
        %v592 = vld [vmem:[%s4 + $0x70] sm:$0xff]
        %v593 = vld [vmem:[%s4 + $0x78] sm:$0xff]
        %594 = vmatpush.msra.mxu0 %v593
        %595 = vmatpush.msra.mxu0 %v592
        %596 = vmatpush.msra.mxu0 %v591
        %597 = vmatpush.msra.mxu0 %v590
        %598 = vmatpush.msra.mxu0 %v589
        %599 = vmatpush.msra.mxu0 %v588
        %600 = vmatpush.msra.mxu0 %v587
        %601 = vmatpush.msra.mxu0 %v586
        %602 = vmatpush.msra.mxu0 %v585
        %603 = vmatpush.msra.mxu0 %v584
        %604 = vmatpush.msra.mxu0 %v583
        %605 = vmatpush.msra.mxu0 %v582
        %606 = vmatpush.msra.mxu0 %v581
        %607 = vmatpush.msra.mxu0 %v580
        %608 = vmatpush.msra.mxu0 %v579
        %609 = vmatpush.msra.mxu0 %v578
        %610 = vmatmul.f32.gmra.mxu0 %v577
        %v611 = vpop.f32.mrf.mxu0
        %v612 = vadd.f32 0.0, %v611
        %613 = vdwg.mxu0
        %v614 = vsel %vm340, %v612, %v518
        %616 = vrot.lane.b32.xlu0 %v614, 32
        %v617 = vpop.permute.xlu0 %616
        %vm619 = vcmask 523520
        %620 = vst.msk [vmem:[%s308] sm:$0xff] %vm619, %v617
        %621 = vset.pattern.permute.xlu0 2
        %622 = vperm.xlu0 %621, %v325
        %v623 = vpop.permute.xlu0 %622
        %vm624 = vcmp.eq.s32.totalorder %v623, %v520
        %v625 = vsel %vm624, 1, 0
        %v626 = vcvt.s32.f32 %v625
        %v627 = vld [vmem:[%s4] sm:$0xff]
        %v628 = vld [vmem:[%s4 + $0x8] sm:$0xff]
        %v629 = vld [vmem:[%s4 + $0x10] sm:$0xff]
        %v630 = vld [vmem:[%s4 + $0x18] sm:$0xff]
        %v631 = vld [vmem:[%s4 + $0x20] sm:$0xff]
        %v632 = vld [vmem:[%s4 + $0x28] sm:$0xff]
        %v633 = vld [vmem:[%s4 + $0x30] sm:$0xff]
        %v634 = vld [vmem:[%s4 + $0x38] sm:$0xff]
        %v635 = vld [vmem:[%s4 + $0x40] sm:$0xff]
        %v636 = vld [vmem:[%s4 + $0x48] sm:$0xff]
        %v637 = vld [vmem:[%s4 + $0x50] sm:$0xff]
        %v638 = vld [vmem:[%s4 + $0x58] sm:$0xff]
        %v639 = vld [vmem:[%s4 + $0x60] sm:$0xff]
        %v640 = vld [vmem:[%s4 + $0x68] sm:$0xff]
        %v641 = vld [vmem:[%s4 + $0x70] sm:$0xff]
        %v642 = vld [vmem:[%s4 + $0x78] sm:$0xff]
        %643 = vmatpush.msra.mxu0 %v642
        %644 = vmatpush.msra.mxu0 %v641
        %645 = vmatpush.msra.mxu0 %v640
        %646 = vmatpush.msra.mxu0 %v639
        %647 = vmatpush.msra.mxu0 %v638
        %648 = vmatpush.msra.mxu0 %v637
        %649 = vmatpush.msra.mxu0 %v636
        %650 = vmatpush.msra.mxu0 %v635
        %651 = vmatpush.msra.mxu0 %v634
        %652 = vmatpush.msra.mxu0 %v633
        %653 = vmatpush.msra.mxu0 %v632
        %654 = vmatpush.msra.mxu0 %v631
        %655 = vmatpush.msra.mxu0 %v630
        %656 = vmatpush.msra.mxu0 %v629
        %657 = vmatpush.msra.mxu0 %v628
        %658 = vmatpush.msra.mxu0 %v627
        %659 = vmatmul.f32.gmra.mxu0 %v626
        %v660 = vpop.f32.mrf.mxu0
        %v661 = vadd.f32 0.0, %v660
        %662 = vdwg.mxu0
        %663 = vrot.lane.b32.xlu0 %v518, 112
        %v664 = vpop.permute.xlu0 %663
        %v666 = vsel %vm340, %v661, %v664
        %668 = vrot.lane.b32.xlu0 %v666, 64
        %v669 = vpop.permute.xlu0 %668
        %vm671 = vcmask 785920
        %672 = vst.msk [vmem:[%s308] sm:$0xff] %vm671, %v669
        %673 = vset.pattern.permute.xlu0 3
        %674 = vperm.xlu0 %673, %v325
        %v675 = vpop.permute.xlu0 %674
        %vm676 = vcmp.eq.s32.totalorder %v675, %v520
        %v677 = vsel %vm676, 1, 0
        %v678 = vcvt.s32.f32 %v677
        %v679 = vld [vmem:[%s4] sm:$0xff]
        %v680 = vld [vmem:[%s4 + $0x8] sm:$0xff]
        %v681 = vld [vmem:[%s4 + $0x10] sm:$0xff]
        %v682 = vld [vmem:[%s4 + $0x18] sm:$0xff]
        %v683 = vld [vmem:[%s4 + $0x20] sm:$0xff]
        %v684 = vld [vmem:[%s4 + $0x28] sm:$0xff]
        %v685 = vld [vmem:[%s4 + $0x30] sm:$0xff]
        %v686 = vld [vmem:[%s4 + $0x38] sm:$0xff]
        %v687 = vld [vmem:[%s4 + $0x40] sm:$0xff]
        %v688 = vld [vmem:[%s4 + $0x48] sm:$0xff]
        %v689 = vld [vmem:[%s4 + $0x50] sm:$0xff]
        %v690 = vld [vmem:[%s4 + $0x58] sm:$0xff]
        %v691 = vld [vmem:[%s4 + $0x60] sm:$0xff]
        %v692 = vld [vmem:[%s4 + $0x68] sm:$0xff]
        %v693 = vld [vmem:[%s4 + $0x70] sm:$0xff]
        %v694 = vld [vmem:[%s4 + $0x78] sm:$0xff]
        %695 = vmatpush.msra.mxu0 %v694
        %696 = vmatpush.msra.mxu0 %v693
        %697 = vmatpush.msra.mxu0 %v692
        %698 = vmatpush.msra.mxu0 %v691
        %699 = vmatpush.msra.mxu0 %v690
        %700 = vmatpush.msra.mxu0 %v689
        %701 = vmatpush.msra.mxu0 %v688
        %702 = vmatpush.msra.mxu0 %v687
        %703 = vmatpush.msra.mxu0 %v686
        %704 = vmatpush.msra.mxu0 %v685
        %705 = vmatpush.msra.mxu0 %v684
        %706 = vmatpush.msra.mxu0 %v683
        %707 = vmatpush.msra.mxu0 %v682
        %708 = vmatpush.msra.mxu0 %v681
        %709 = vmatpush.msra.mxu0 %v680
        %710 = vmatpush.msra.mxu0 %v679
        %711 = vmatmul.f32.gmra.mxu0 %v678
        %v712 = vpop.f32.mrf.mxu0
        %v713 = vadd.f32 0.0, %v712
        %714 = vdwg.mxu0
        %715 = vrot.lane.b32.xlu0 %v518, 96
        %v716 = vpop.permute.xlu0 %715
        %v718 = vsel %vm340, %v713, %v716
        %720 = vrot.lane.b32.xlu0 %v718, 96
        %v721 = vpop.permute.xlu0 %720
        %vm723 = vcmask 1048320
        %724 = vst.msk [vmem:[%s308] sm:$0xff] %vm723, %v721
        %725 = vset.pattern.permute.xlu0 4
        %726 = vperm.xlu0 %725, %v325
        %v727 = vpop.permute.xlu0 %726
        %vm728 = vcmp.eq.s32.totalorder %v727, %v520
        %v729 = vsel %vm728, 1, 0
        %v730 = vcvt.s32.f32 %v729
        %v731 = vld [vmem:[%s4] sm:$0xff]
        %v732 = vld [vmem:[%s4 + $0x8] sm:$0xff]
        %v733 = vld [vmem:[%s4 + $0x10] sm:$0xff]
        %v734 = vld [vmem:[%s4 + $0x18] sm:$0xff]
        %v735 = vld [vmem:[%s4 + $0x20] sm:$0xff]
        %v736 = vld [vmem:[%s4 + $0x28] sm:$0xff]
        %v737 = vld [vmem:[%s4 + $0x30] sm:$0xff]
        %v738 = vld [vmem:[%s4 + $0x38] sm:$0xff]
        %v739 = vld [vmem:[%s4 + $0x40] sm:$0xff]
        %v740 = vld [vmem:[%s4 + $0x48] sm:$0xff]
        %v741 = vld [vmem:[%s4 + $0x50] sm:$0xff]
        %v742 = vld [vmem:[%s4 + $0x58] sm:$0xff]
        %v743 = vld [vmem:[%s4 + $0x60] sm:$0xff]
        %v744 = vld [vmem:[%s4 + $0x68] sm:$0xff]
        %v745 = vld [vmem:[%s4 + $0x70] sm:$0xff]
        %v746 = vld [vmem:[%s4 + $0x78] sm:$0xff]
        %747 = vmatpush.msra.mxu0 %v746
        %748 = vmatpush.msra.mxu0 %v745
        %749 = vmatpush.msra.mxu0 %v744
        %750 = vmatpush.msra.mxu0 %v743
        %751 = vmatpush.msra.mxu0 %v742
        %752 = vmatpush.msra.mxu0 %v741
        %753 = vmatpush.msra.mxu0 %v740
        %754 = vmatpush.msra.mxu0 %v739
        %755 = vmatpush.msra.mxu0 %v738
        %756 = vmatpush.msra.mxu0 %v737
        %757 = vmatpush.msra.mxu0 %v736
        %758 = vmatpush.msra.mxu0 %v735
        %759 = vmatpush.msra.mxu0 %v734
        %760 = vmatpush.msra.mxu0 %v733
        %761 = vmatpush.msra.mxu0 %v732
        %762 = vmatpush.msra.mxu0 %v731
        %763 = vmatmul.f32.gmra.mxu0 %v730
        %v764 = vpop.f32.mrf.mxu0
        %v765 = vadd.f32 0.0, %v764
        %766 = vdwg.mxu0
        %767 = vrot.lane.b32.xlu0 %v518, 80
        %v768 = vpop.permute.xlu0 %767
        %v770 = vsel %vm340, %v765, %v768
        %771 = vst.msk [vmem:[%s308 + $0x8] sm:$0xff] %vm570, %v770
        %772 = vset.pattern.permute.xlu0 5
        %773 = vperm.xlu0 %772, %v325
        %v774 = vpop.permute.xlu0 %773
        %vm775 = vcmp.eq.s32.totalorder %v774, %v520
        %v776 = vsel %vm775, 1, 0
        %v777 = vcvt.s32.f32 %v776
        %v778 = vld [vmem:[%s4] sm:$0xff]
        %v779 = vld [vmem:[%s4 + $0x8] sm:$0xff]
        %v780 = vld [vmem:[%s4 + $0x10] sm:$0xff]
        %v781 = vld [vmem:[%s4 + $0x18] sm:$0xff]
        %v782 = vld [vmem:[%s4 + $0x20] sm:$0xff]
        %v783 = vld [vmem:[%s4 + $0x28] sm:$0xff]
        %v784 = vld [vmem:[%s4 + $0x30] sm:$0xff]
        %v785 = vld [vmem:[%s4 + $0x38] sm:$0xff]
        %v786 = vld [vmem:[%s4 + $0x40] sm:$0xff]
        %v787 = vld [vmem:[%s4 + $0x48] sm:$0xff]
        %v788 = vld [vmem:[%s4 + $0x50] sm:$0xff]
        %v789 = vld [vmem:[%s4 + $0x58] sm:$0xff]
        %v790 = vld [vmem:[%s4 + $0x60] sm:$0xff]
        %v791 = vld [vmem:[%s4 + $0x68] sm:$0xff]
        %v792 = vld [vmem:[%s4 + $0x70] sm:$0xff]
        %v793 = vld [vmem:[%s4 + $0x78] sm:$0xff]
        %794 = vmatpush.msra.mxu0 %v793
        %795 = vmatpush.msra.mxu0 %v792
        %796 = vmatpush.msra.mxu0 %v791
        %797 = vmatpush.msra.mxu0 %v790
        %798 = vmatpush.msra.mxu0 %v789
        %799 = vmatpush.msra.mxu0 %v788
        %800 = vmatpush.msra.mxu0 %v787
        %801 = vmatpush.msra.mxu0 %v786
        %802 = vmatpush.msra.mxu0 %v785
        %803 = vmatpush.msra.mxu0 %v784
        %804 = vmatpush.msra.mxu0 %v783
        %805 = vmatpush.msra.mxu0 %v782
        %806 = vmatpush.msra.mxu0 %v781
        %807 = vmatpush.msra.mxu0 %v780
        %808 = vmatpush.msra.mxu0 %v779
        %809 = vmatpush.msra.mxu0 %v778
        %810 = vmatmul.f32.gmra.mxu0 %v777
        %v811 = vpop.f32.mrf.mxu0
        %v812 = vadd.f32 0.0, %v811
        %813 = vdwg.mxu0
        %814 = vrot.lane.b32.xlu0 %v518, 64
        %v815 = vpop.permute.xlu0 %814
        %v817 = vsel %vm340, %v812, %v815
        %819 = vrot.lane.b32.xlu0 %v817, 32
        %v820 = vpop.permute.xlu0 %819
        %822 = vst.msk [vmem:[%s308 + $0x8] sm:$0xff] %vm619, %v820
        %823 = vset.pattern.permute.xlu0 6
        %824 = vperm.xlu0 %823, %v325
        %v825 = vpop.permute.xlu0 %824
        %vm826 = vcmp.eq.s32.totalorder %v825, %v520
        %v827 = vsel %vm826, 1, 0
        %v828 = vcvt.s32.f32 %v827
        %v829 = vld [vmem:[%s4] sm:$0xff]
        %v830 = vld [vmem:[%s4 + $0x8] sm:$0xff]
        %v831 = vld [vmem:[%s4 + $0x10] sm:$0xff]
        %v832 = vld [vmem:[%s4 + $0x18] sm:$0xff]
        %v833 = vld [vmem:[%s4 + $0x20] sm:$0xff]
        %v834 = vld [vmem:[%s4 + $0x28] sm:$0xff]
        %v835 = vld [vmem:[%s4 + $0x30] sm:$0xff]
        %v836 = vld [vmem:[%s4 + $0x38] sm:$0xff]
        %v837 = vld [vmem:[%s4 + $0x40] sm:$0xff]
        %v838 = vld [vmem:[%s4 + $0x48] sm:$0xff]
        %v839 = vld [vmem:[%s4 + $0x50] sm:$0xff]
        %v840 = vld [vmem:[%s4 + $0x58] sm:$0xff]
        %v841 = vld [vmem:[%s4 + $0x60] sm:$0xff]
        %v842 = vld [vmem:[%s4 + $0x68] sm:$0xff]
        %v843 = vld [vmem:[%s4 + $0x70] sm:$0xff]
        %v844 = vld [vmem:[%s4 + $0x78] sm:$0xff]
        %845 = vmatpush.msra.mxu0 %v844
        %846 = vmatpush.msra.mxu0 %v843
        %847 = vmatpush.msra.mxu0 %v842
        %848 = vmatpush.msra.mxu0 %v841
        %849 = vmatpush.msra.mxu0 %v840
        %850 = vmatpush.msra.mxu0 %v839
        %851 = vmatpush.msra.mxu0 %v838
        %852 = vmatpush.msra.mxu0 %v837
        %853 = vmatpush.msra.mxu0 %v836
        %854 = vmatpush.msra.mxu0 %v835
        %855 = vmatpush.msra.mxu0 %v834
        %856 = vmatpush.msra.mxu0 %v833
        %857 = vmatpush.msra.mxu0 %v832
        %858 = vmatpush.msra.mxu0 %v831
        %859 = vmatpush.msra.mxu0 %v830
        %860 = vmatpush.msra.mxu0 %v829
        %861 = vmatmul.f32.gmra.mxu0 %v828
        %v862 = vpop.f32.mrf.mxu0
        %v863 = vadd.f32 0.0, %v862
        %864 = vdwg.mxu0
        %865 = vrot.lane.b32.xlu0 %v518, 48
        %v866 = vpop.permute.xlu0 %865
        %v868 = vsel %vm340, %v863, %v866
        %870 = vrot.lane.b32.xlu0 %v868, 64
        %v871 = vpop.permute.xlu0 %870
        %873 = vst.msk [vmem:[%s308 + $0x8] sm:$0xff] %vm671, %v871
        %874 = vset.pattern.permute.xlu0 7
        %875 = vperm.xlu0 %874, %v325
        %v876 = vpop.permute.xlu0 %875
        %vm877 = vcmp.eq.s32.totalorder %v876, %v520
        %v878 = vsel %vm877, 1, 0
        %v879 = vcvt.s32.f32 %v878
        %v880 = vld [vmem:[%s4] sm:$0xff]
        %v881 = vld [vmem:[%s4 + $0x8] sm:$0xff]
        %v882 = vld [vmem:[%s4 + $0x10] sm:$0xff]
        %v883 = vld [vmem:[%s4 + $0x18] sm:$0xff]
        %v884 = vld [vmem:[%s4 + $0x20] sm:$0xff]
        %v885 = vld [vmem:[%s4 + $0x28] sm:$0xff]
        %v886 = vld [vmem:[%s4 + $0x30] sm:$0xff]
        %v887 = vld [vmem:[%s4 + $0x38] sm:$0xff]
        %v888 = vld [vmem:[%s4 + $0x40] sm:$0xff]
        %v889 = vld [vmem:[%s4 + $0x48] sm:$0xff]
        %v890 = vld [vmem:[%s4 + $0x50] sm:$0xff]
        %v891 = vld [vmem:[%s4 + $0x58] sm:$0xff]
        %v892 = vld [vmem:[%s4 + $0x60] sm:$0xff]
        %v893 = vld [vmem:[%s4 + $0x68] sm:$0xff]
        %v894 = vld [vmem:[%s4 + $0x70] sm:$0xff]
        %v895 = vld [vmem:[%s4 + $0x78] sm:$0xff]
        %896 = vmatpush.msra.mxu0 %v895
        %897 = vmatpush.msra.mxu0 %v894
        %898 = vmatpush.msra.mxu0 %v893
        %899 = vmatpush.msra.mxu0 %v892
        %900 = vmatpush.msra.mxu0 %v891
        %901 = vmatpush.msra.mxu0 %v890
        %902 = vmatpush.msra.mxu0 %v889
        %903 = vmatpush.msra.mxu0 %v888
        %904 = vmatpush.msra.mxu0 %v887
        %905 = vmatpush.msra.mxu0 %v886
        %906 = vmatpush.msra.mxu0 %v885
        %907 = vmatpush.msra.mxu0 %v884
        %908 = vmatpush.msra.mxu0 %v883
        %909 = vmatpush.msra.mxu0 %v882
        %910 = vmatpush.msra.mxu0 %v881
        %911 = vmatpush.msra.mxu0 %v880
        %912 = vmatmul.f32.gmra.mxu0 %v879
        %v913 = vpop.f32.mrf.mxu0
        %v914 = vadd.f32 0.0, %v913
        %915 = vdwg.mxu0
        %916 = vrot.lane.b32.xlu0 %v518, 32
        %v917 = vpop.permute.xlu0 %916
        %v919 = vsel %vm340, %v914, %v917
        %921 = vrot.lane.b32.xlu0 %v919, 96
        %v922 = vpop.permute.xlu0 %921
        %924 = vst.msk [vmem:[%s308 + $0x8] sm:$0xff] %vm723, %v922
        %s925 = sand.u32 %s196, 1
        %s926 = scalar_lea.sflag [#allocation3], %s925
        %s927 = sand.u32 %s196, 1
        %s928 = smul.addr %s927, 16
        %s929 = scalar_lea.vmem [#allocation2], %s928
        // Predicated region
        $region49: #{tpu_custom_call.1} parent=47 // pred_check
          %p930 = pneg %p206
        $region50: #{tpu_custom_call.1} parent=47 // pred_check_branch
          %932 = sbr.rel (%p930) target = $region52
        $region51: #{tpu_custom_call.1} parent=47 // pred_region
          %934 = vsyncadd %s926, 0
          %s935 = smul.addr %s21, 2
          %s936 = smul.addr %s935, 8
          %s937 = scalar_lea.hbm %s7, %s936
          %s939 = sshll.u32 %s929, 4
          %s940 = int_to_ptr.vmem [resolvable:$true] %s939
          %s941 = sshll.u32 %s937, 4
          %s942 = int_to_ptr.hbm [resolvable:$true] %s941
          %944 = dma.vmem_to_hbm [thread:$0]  %s940, 256, %s942, %s926
        $region52: #{tpu_custom_call.1} parent=47 // pred_fallthru
          _
      $region48: #{tpu_custom_call.1} parent=5 // pred_fallthru
        _
      %p945 = scmp.le.s32.totalorder 2, %s16
      // Predicated region
      $region53: #{tpu_custom_call.1} parent=5 // pred_check
        %p946 = pneg %p945
      $region54: #{tpu_custom_call.1} parent=5 // pred_check_branch
        %948 = sbr.rel (%p946) target = $region56
      $region55: #{tpu_custom_call.1} parent=5 // pred_region
        %s949 = ssub.s32 %s16, 2
        // Predicated region
        $region57: #{tpu_custom_call.1} parent=55 // pred_check
          %p950 = pneg %p212
        $region58: #{tpu_custom_call.1} parent=55 // pred_check_branch
          %952 = sbr.rel (%p950) target = $region60
        $region59: #{tpu_custom_call.1} parent=55 // pred_region
          %s953 = sand.u32 %s197, 1
          %s954 = scalar_lea.sflag [#allocation3], %s953
          %s955 = sand.u32 %s197, 1
          %s956 = smul.addr %s955, 16
          %s957 = scalar_lea.vmem [#allocation2], %s956
          %959 = dma.done %s954, 256
        $region60: #{tpu_custom_call.1} parent=55 // pred_fallthru
          _
      $region56: #{tpu_custom_call.1} parent=5 // pred_fallthru
        _
    $region6: #{tpu_custom_call.1} parent=1 // loop_footer
      %s20 = sadd.s32 1, %s16
    $region7: #{tpu_custom_call.1} parent=1 // loop_footer_branch
      %15 = sbr.rel target = $region3
    $region8: #{tpu_custom_call.1} parent=1 // loop_exit
      _
    %960 = vsyncpa [#allocation3], 1
    %s961 = scalar_lea.sflag [#allocation3], 1
    %962 = vsyncpa %s961, 1

</llo_original>
